<compile_context>
chip_gen: v7x
topology: tpu7x:2x2x1
jax: 0.10.0
libtpu: 0.0.40
codegen_flags: <defaults>
</compile_context>

<pallas_src>
import math
import jax
import jax.numpy as jnp
from jax.experimental import pallas as pl
from jax.experimental.pallas import tpu as pltpu


def _add_pe_kernel(x_ref, pe_ref, o_ref):
    # Pure VPU elementwise add. pe_ref's leading dim is 1, so it broadcasts over
    # the batch rows of x_ref in the batch-tiled path. If pe is stored in f32
    # and x is bf16, jnp promotion does the add in f32; the store casts down.
    o_ref[...] = (x_ref[...] + pe_ref[...]).astype(o_ref.dtype)


def make_pe(max_len: int, d_model: int, dtype=jnp.float32) -> jnp.ndarray:
    """Positional-encoding buffer identical to the PyTorch __init__ (odd d_model safe).

    Pass dtype=x.dtype at construction time to avoid any per-call cast traffic.
    """
    position = jnp.arange(max_len, dtype=jnp.float32)[:, None]               # [L, 1]
    div_term = jnp.exp(
        jnp.arange(0, d_model, 2, dtype=jnp.float32)
        * (-math.log(10000.0) / d_model)
    )                                                                         # [ceil(D/2)]
    pe = jnp.zeros((max_len, d_model), dtype=jnp.float32)
    pe = pe.at[:, 0::2].set(jnp.sin(position * div_term))                     # ceil(D/2) cols
    pe = pe.at[:, 1::2].set(jnp.cos(position * div_term[: d_model // 2]))     # floor(D/2) cols
    return pe[None, :, :].astype(dtype)                                       # [1, L, D]


def _target_block_bytes() -> int:
    """DMA-tile sweet spot, generation-aware.

    v7x's 3.2 TB/s HBM makes the ~0.35 us per-step pipeline overhead a much
    larger fraction of each step, so use bigger tiles there; 4 MiB is already
    at ~85%+ of the HBM roofline on v5e/v6e.
    """
    try:
        info = pltpu.get_tpu_info()
        name = "".join(
            str(getattr(info, attr, ""))
            for attr in ("chip_version", "chip_name", "name")
        )
        if "7" in name:
            return 8 * 1024 * 1024
    except Exception:
        pass
    return 4 * 1024 * 1024


def positional_encoding_forward(
    x: jnp.ndarray, pe: jnp.ndarray, *, donate_x: bool = False
) -> jnp.ndarray:
    """x: [B, L, D], pe: [1, max_len>=L, D]  ->  [B, L, D] (in x.dtype).

    donate_x: only set True when x's buffer is genuinely dead after this call
    (intermediate inside a larger jit / donate_argnums); otherwise XLA inserts
    a defensive copy of x that costs a full extra HBM pass.
    """
    B, L, D = x.shape
    assert pe.ndim == 3 and pe.shape[0] == 1 and pe.shape[2] == D
    max_len = pe.shape[1]
    assert max_len >= L

    # Rare edge case only: a (1, L, D) pe block needs L % 8 == 0 or L == max_len
    # to satisfy the (8,128) block constraint. Only then do a one-time wrapper
    # slice; in the PyTorch-spec case (L == max_len) pe is passed untouched.
    if max_len != L and L % 8 != 0:
        pe = pe[:, :L, :]
        max_len = L

    itemsize = x.dtype.itemsize
    target = _target_block_bytes()
    row_bytes = L * D * itemsize  # bytes of one batch row of x

    aliases = {0: 0} if donate_x else {}

    # TODO(synk): for D not a multiple of 128 a lane-dense (B, L*D) flattening
    # avoids masked partial stores, but the required relayout of x/pe is itself
    # a full HBM pass on TPU's tiled layouts, so it is not applied here.
    # TODO(synk): for B <= 2 the pe tile could be generated in-kernel
    # (iota + sin/cos on the otherwise-idle EUP) instead of streamed from HBM.

    if L >= 8 and row_bytes >= target:
        # ---- long-sequence path: tile the L axis ---------------------------
        tl = (target // (D * itemsize)) // 8 * 8
        tl = max(8, min(tl, (L // 8) * 8))
        # L-tiles outer, batch inner: the pe block index is constant across the
        # inner axis, so each pe tile is DMA'd from HBM only once per L tile.
        grid = (pl.cdiv(L, tl), B)
        in_specs = [
            pl.BlockSpec((1, tl, D), lambda l, b: (b, l, 0)),   # x
            pl.BlockSpec((1, tl, D), lambda l, b: (0, l, 0)),   # pe (reused over b)
        ]
        out_spec = pl.BlockSpec((1, tl, D), lambda l, b: (b, l, 0))
        block_bytes = tl * D * itemsize
        dims = ("parallel", "parallel")
    else:
        # ---- batch-tiled path (typical transformer shapes & small problems) -
        # L*D alone is below the DMA sweet spot, so grow the block along the
        # batch dim instead of accepting a tiny per-step block.
        tb = max(1, min(B, target // max(row_bytes, 1)))
        grid = (pl.cdiv(B, tb),)
        in_specs = [
            pl.BlockSpec((tb, L, D), lambda b: (b, 0, 0)),      # x
            pl.BlockSpec((1, L, D), lambda b: (0, 0, 0)),       # pe (broadcast in-kernel)
        ]
        out_spec = pl.BlockSpec((tb, L, D), lambda b: (b, 0, 0))
        block_bytes = tb * row_bytes
        dims = ("parallel",)

    # x + out + pe, double-buffered (~6 blocks) plus headroom; cap below v7x's
    # 64 MiB per-TC physical VMEM. Explicit limit also covers v5e's 16 MiB
    # default scoped limit.
    vmem_limit = int(max(16 << 20, min(6 * block_bytes + (8 << 20), 60 << 20)))

    grid_spec = pltpu.PrefetchScalarGridSpec(
        num_scalar_prefetch=0,
        grid=grid,
        in_specs=in_specs,
        out_specs=out_spec,
    )

    out = pl.pallas_call(
        _add_pe_kernel,
        out_shape=jax.ShapeDtypeStruct((B, L, D), x.dtype),
        grid_spec=grid_spec,
        input_output_aliases=aliases,
        compiler_params=pltpu.CompilerParams(
            dimension_semantics=dims,
            vmem_limit_bytes=vmem_limit,
        ),
    )(x, pe)
    return out


if __name__ == "__main__":
    batch, max_len, d_model = 2, 8, 32

    key = jax.random.PRNGKey(0)
    x = jax.random.normal(key, (batch, max_len, d_model), dtype=jnp.float32)
    # Store pe in x.dtype at construction (no per-call cast pass).
    pe = make_pe(max_len, d_model, dtype=x.dtype)

    # Pure-JAX reference of the PyTorch forward.
    ref = x + pe

    fwd = jax.jit(positional_encoding_forward)
    out = jax.block_until_ready(fwd(x, pe))

    assert out.shape == (batch, max_len, d_model)
    assert out.dtype == x.dtype
    assert jnp.allclose(out, ref, atol=1e-6), "mismatch vs reference"

    print("KERNEL_OK")
</pallas_src>

<mosaic_0001>
module attributes {stable_mosaic.version = 11 : i64} {
  func.func @_add_pe_kernel(%arg0: i32, %arg1: memref<2x8x32xf32, #tpu.memory_space<vmem>>, %arg2: memref<1x8x32xf32, #tpu.memory_space<vmem>>, %arg3: memref<2x8x32xf32, #tpu.memory_space<vmem>>) attributes {dimension_semantics = [#tpu.dimension_semantics<parallel>], iteration_bounds = array<i64: 1>, scalar_prefetch = 0 : i64, scratch_operands = 0 : i64, tpu.core_type = #tpu.core_type<tc>, window_params = [{transform_indices = @transform_0, window_bounds = array<i64: 2, 8, 32>}, {pipeline_mode = #tpu.pipeline_mode<synchronous>, transform_indices = @transform_1, window_bounds = array<i64: 1, 8, 32>}, {transform_indices = @transform_2, window_bounds = array<i64: 2, 8, 32>}]} {
    %c0 = arith.constant 0 : index
    %c0_0 = arith.constant 0 : index
    %c0_1 = arith.constant 0 : index
    %0 = vector.load %arg1[%c0, %c0_0, %c0_1] : memref<2x8x32xf32, #tpu.memory_space<vmem>>, vector<2x8x32xf32>
    %c0_2 = arith.constant 0 : index
    %c0_3 = arith.constant 0 : index
    %c0_4 = arith.constant 0 : index
    %1 = vector.load %arg2[%c0_2, %c0_3, %c0_4] : memref<1x8x32xf32, #tpu.memory_space<vmem>>, vector<1x8x32xf32>
    %2 = vector.broadcast %1 : vector<1x8x32xf32> to vector<2x8x32xf32>
    %3 = arith.addf %0, %2 : vector<2x8x32xf32>
    %c0_5 = arith.constant 0 : index
    %c0_6 = arith.constant 0 : index
    %c0_7 = arith.constant 0 : index
    %4 = vector.load %arg3[%c0_5, %c0_6, %c0_7] : memref<2x8x32xf32, #tpu.memory_space<vmem>>, vector<2x8x32xf32>
    tpu.vector_store %arg3[%c0_5, %c0_6, %c0_7], %3 {strides = array<i32>} : memref<2x8x32xf32, #tpu.memory_space<vmem>>, vector<2x8x32xf32>,
    return
  }
  func.func @transform_0(%arg0: i32) -> (i32, i32, i32) {
    %c0_i32 = arith.constant 0 : i32
    %c0_i32_0 = arith.constant 0 : i32
    %c0_i32_1 = arith.constant 0 : i32
    return %arg0, %c0_i32, %c0_i32_0 : i32, i32, i32
  }
  func.func @transform_1(%arg0: i32) -> (i32, i32, i32) {
    %c0_i32 = arith.constant 0 : i32
    %c0_i32_0 = arith.constant 0 : i32
    %c0_i32_1 = arith.constant 0 : i32
    %c0_i32_2 = arith.constant 0 : i32
    return %c0_i32, %c0_i32_0, %c0_i32_1 : i32, i32, i32
  }
  func.func @transform_2(%arg0: i32) -> (i32, i32, i32) {
    %c0_i32 = arith.constant 0 : i32
    %c0_i32_0 = arith.constant 0 : i32
    %c0_i32_1 = arith.constant 0 : i32
    return %arg0, %c0_i32, %c0_i32_0 : i32, i32, i32
  }
}

</mosaic_0001>

<llo_original>
// kernel: positional_encoding_forward.1
$region0: #{positional_encoding_forward.1}
  #allocation0 [shape = 'u32[]', space=smem, size = 0x4, offset = 0x4, fixed_abs, tag = 'smem constant byte address 0x4 - core index']
  #allocation1 [shape = 'u32[144,128]{1,0:T(1,128)}', space=vmem, size = 0x12000, scoped, tag = 'internal scratch']
  %s0 = inlined_call_operand.hbm [shape: f32[2,8,32], index: 0, kind: input, shape index: {}]
  %s1 = inlined_call_operand.hbm [shape: f32[1,8,32], index: 1, kind: input, shape index: {}]
  %s2 = inlined_call_operand.hbm [shape: f32[2,8,32], index: 2, kind: output, shape index: {}]
  %s3 = sld [smem:[#allocation0]]
  $region26: #{positional_encoding_forward.1} parent=0
    _
  %s5 = ssub.s32 1, %s3
  %s6 = scalar_select 0, %s5, %s3
  $region1: #{positional_encoding_forward.1} parent=0
    #allocation2 [shape = 'u8[8192]{0}', space=vmem, size = 0x2000, scoped, tag = 'input window, operand 0, single buffered']
    #allocation3 [shape = 's32[1]{0}', space=sflag, size = 0x4, scoped, tag = 'scoped memory for positional_encoding_forward.1']
    #allocation4 [shape = 's32[1]{0}', space=sflag, size = 0x4, scoped, tag = 'scoped memory for positional_encoding_forward.1']
    #allocation5 [shape = 'u8[4096]{0}', space=vmem, size = 0x1000, scoped, tag = 'input window, operand 1, single buffered']
    #allocation6 [shape = 's32[1]{0}', space=sflag, size = 0x4, scoped, tag = 'scoped memory for positional_encoding_forward.1']
    #allocation7 [shape = 'u8[8192]{0}', space=vmem, size = 0x2000, scoped, tag = 'output window, operand 0, single buffered']
    %7 = vsyncpa [#allocation3], 0
    %8 = vsyncpa [#allocation6], 0
    %9 = vsyncpa [#allocation4], 0
    // Predicated region
    $region2: #{positional_encoding_forward.1} parent=1 // pred_check
      _
    $region3: #{positional_encoding_forward.1} parent=1 // pred_check_branch
      %11 = sbr.rel (0) target = $region5
    $region4: #{positional_encoding_forward.1} parent=1 // pred_region
      %s13 = ssub.s32 256, 256
      %14 = vsyncadd [#allocation3], %s13
      %s15 = sshll.u32 [#allocation2], 4
      %s16 = int_to_ptr.vmem [resolvable:$true] %s15
      %21 = dma.hbm_to_vmem [thread:$0]  %s0, 256, %s16, [#allocation3], 128, 128, 8
    $region5: #{positional_encoding_forward.1} parent=1 // pred_fallthru
      _
    // Predicated region
    $region6: #{positional_encoding_forward.1} parent=1 // pred_check
      _
    $region7: #{positional_encoding_forward.1} parent=1 // pred_check_branch
      %23 = sbr.rel (0) target = $region9
    $region8: #{positional_encoding_forward.1} parent=1 // pred_region
      %s25 = ssub.s32 128, 128
      %26 = vsyncadd [#allocation6], %s25
      %s28 = sshll.u32 [#allocation5], 4
      %s29 = int_to_ptr.vmem [resolvable:$true] %s28
      %31 = dma.hbm_to_vmem [thread:$0]  %s1, 128, %s29, [#allocation6]
    $region9: #{positional_encoding_forward.1} parent=1 // pred_fallthru
      _
    // Predicated region
    $region10: #{positional_encoding_forward.1} parent=1 // pred_check
      _
    $region11: #{positional_encoding_forward.1} parent=1 // pred_check_branch
      %33 = sbr.rel (0) target = $region13
    $region12: #{positional_encoding_forward.1} parent=1 // pred_region
      %34 = dma.done [#allocation3], 256
    $region13: #{positional_encoding_forward.1} parent=1 // pred_fallthru
      _
    // Predicated region
    $region14: #{positional_encoding_forward.1} parent=1 // pred_check
      _
    $region15: #{positional_encoding_forward.1} parent=1 // pred_check_branch
      %36 = sbr.rel (0) target = $region17
    $region16: #{positional_encoding_forward.1} parent=1 // pred_region
      %37 = dma.done [#allocation6], 128
    $region17: #{positional_encoding_forward.1} parent=1 // pred_fallthru
      _
    %v38 = vld [vmem:[#allocation2] sm:$0xff]
    %v39 = vld [vmem:[#allocation2 + $0x8] sm:$0xff]
    %v40 = vld [vmem:[#allocation5] sm:$0xff]
    %v41 = vadd.f32 %v38, %v40
    %v42 = vadd.f32 %v39, %v40
    %vm43 = vcmask 261120
    %44 = vst.msk [vmem:[#allocation7] sm:$0xff] %vm43, %v41
    %45 = vst.msk [vmem:[#allocation7 + $0x8] sm:$0xff] %vm43, %v42
    // Predicated region
    $region18: #{positional_encoding_forward.1} parent=1 // pred_check
      _
    $region19: #{positional_encoding_forward.1} parent=1 // pred_check_branch
      %47 = sbr.rel (0) target = $region21
    $region20: #{positional_encoding_forward.1} parent=1 // pred_region
      %s49 = ssub.s32 256, 256
      %50 = vsyncadd [#allocation4], %s49
      %s51 = sshll.u32 [#allocation7], 4
      %s52 = int_to_ptr.vmem [resolvable:$true] %s51
      %57 = dma.vmem_to_hbm [thread:$0]  %s52, 256, %s2, [#allocation4], 128, 128, 8
    $region21: #{positional_encoding_forward.1} parent=1 // pred_fallthru
      _
    // Predicated region
    $region22: #{positional_encoding_forward.1} parent=1 // pred_check
      _
    $region23: #{positional_encoding_forward.1} parent=1 // pred_check_branch
      %59 = sbr.rel (0) target = $region25
    $region24: #{positional_encoding_forward.1} parent=1 // pred_region
      %60 = dma.done [#allocation4], 256
    $region25: #{positional_encoding_forward.1} parent=1 // pred_fallthru
      _
    %61 = vsyncpa [#allocation3], 1
    %62 = vsyncpa [#allocation6], 1
    %63 = vsyncpa [#allocation4], 1

</llo_original>
